<compile_context>
chip_gen: v7x
topology: tpu7x:2x2x1
jax: 0.10.0
libtpu: 0.0.40
codegen_flags: <defaults>
</compile_context>

<pallas_src>
import functools
import math

import jax
import jax.numpy as jnp
from jax.experimental import pallas as pl
from jax.experimental.pallas import tpu as pltpu


# ----------------------------------------------------------------------------
# Fused kernel: embed -> rsample -> log_prob -> forward couplings
# ----------------------------------------------------------------------------

def _nice_fused_kernel(*refs, n_layers, swaps, D, logz_const):
    x_ref, eps_ref, w_emb_ref, b_emb_ref = refs[:4]
    layer_refs = refs[4:4 + 4 * n_layers]
    y_ref, lp_ref = refs[4 + 4 * n_layers:]

    half = D // 2
    x = x_ref[...]
    eps = eps_ref[...]

    # Single fused embedding matmul: (tile_b, Din) @ (Din, 2D) -> (mu | log_sigma).
    h = jnp.dot(x, w_emb_ref[...], preferred_element_type=jnp.float32) + b_emb_ref[...]
    mu = h[:, :D]
    ls = h[:, D:]

    # Reparameterized sample of the base Gaussian.
    z = mu + jnp.exp(ls) * eps

    # TransformedDistribution.log_prob of the model's own sample:
    #   additive couplings have log|det J| = 0 and are exactly invertible, so
    #   the inverse round-trip returns z, and (z - mu)/sigma == eps exactly.
    # Computed here (before the coupling loop) so mu/ls live ranges end early.
    lp_ref[...] = (jnp.sum(-0.5 * eps * eps - ls, axis=-1, keepdims=True)
                   + logz_const)

    # ComposeTransform forward: additive couplings, m = W2 relu(W1 xa + b1) + b2.
    # 'swap' selects which half conditions / which half is shifted — resolved
    # at trace time, so it is pure argument routing (no in-kernel shuffles).
    ya = z[:, :half]
    yb = z[:, half:]
    for li in range(n_layers):
        w1 = layer_refs[4 * li][...]
        b1 = layer_refs[4 * li + 1][...]
        w2 = layer_refs[4 * li + 2][...]
        b2 = layer_refs[4 * li + 3][...]
        cond, trans = (yb, ya) if swaps[li] else (ya, yb)
        hc = jnp.maximum(
            jnp.dot(cond, w1, preferred_element_type=jnp.float32) + b1, 0.0)
        m = jnp.dot(hc, w2, preferred_element_type=jnp.float32) + b2
        trans = trans + m
        if swaps[li]:
            ya, yb = trans, cond
        else:
            ya, yb = cond, trans

    # One (tile_b, D) output; static-slice stores (no wrapper concat needed).
    y_ref[:, :half] = ya
    y_ref[:, half:] = yb


# ----------------------------------------------------------------------------
# Wrapper
# ----------------------------------------------------------------------------

@functools.partial(jax.jit, static_argnames=("swaps", "tile_b"))
def nice_forward(x, eps, params, *, swaps, tile_b=None):
    """Returns (y_sample, log_prob(y_sample)) of the TransformedDistribution."""
    B, Din = x.shape
    D = eps.shape[-1]
    n_layers = len(params["couplings"])
    swaps = tuple(bool(s) for s in swaps)

    if tile_b is None:
        # Large tiles amortize per-grid-step overhead; cap at 1024 rows
        # (double-buffered I/O stays < 2 MiB f32, well inside VMEM on all
        # generations) and keep >=2 balanced steps when B allows it so v7x's
        # two TensorCores both get work.
        tile_b = max(8, min(1024, ((pl.cdiv(B, 2) + 7) // 8) * 8))

    grid = (pl.cdiv(B, tile_b),)
    # Note: if B % tile_b != 0 the final partial block reads unspecified rows;
    # all math is row-local and writeback is clipped, so valid rows are exact.

    inputs = [x, eps, params["w_embed"], params["b_embed"]]
    for (w1, b1, w2, b2) in params["couplings"]:
        inputs += [w1, b1, w2, b2]

    def batch_spec(feat):
        return pl.BlockSpec((tile_b, feat), lambda i: (i, 0))

    def full_spec(arr):
        nd = arr.ndim
        return pl.BlockSpec(arr.shape, lambda i, _nd=nd: (0,) * _nd)

    in_specs = ([batch_spec(Din), batch_spec(D)]
                + [full_spec(a) for a in inputs[2:]])

    out_shape = (jax.ShapeDtypeStruct((B, D), jnp.float32),   # sample y
                 jax.ShapeDtypeStruct((B, 1), jnp.float32))   # log_prob
    # (B, 1) log_prob block is a known minor cost (narrow masked stores);
    # bytes are tiny, so we keep the natural shape.
    out_specs = (batch_spec(D), batch_spec(1))

    kern = functools.partial(
        _nice_fused_kernel,
        n_layers=n_layers,
        swaps=swaps,
        D=D,
        logz_const=-0.5 * D * math.log(2.0 * math.pi),
    )

    y, lp = pl.pallas_call(
        kern,
        out_shape=out_shape,
        grid=grid,
        in_specs=in_specs,
        out_specs=out_specs,
        compiler_params=pltpu.CompilerParams(dimension_semantics=("parallel",)),
    )(*inputs)

    return y, lp


# ----------------------------------------------------------------------------
# Pure-JAX reference (includes the full inverse round-trip that the kernel
# elides) — used to validate forward-pass semantics.
# ----------------------------------------------------------------------------

def nice_forward_reference(x, eps, params, swaps):
    D = eps.shape[-1]
    half = D // 2
    h = x @ params["w_embed"] + params["b_embed"]
    mu, ls = h[:, :D], h[:, D:]
    sig = jnp.exp(ls)
    z = mu + sig * eps

    def split(v, swap):
        return (v[:, half:], v[:, :half]) if swap else (v[:, :half], v[:, half:])

    def join(xa, yb, swap):
        return jnp.concatenate([yb, xa], -1) if swap else jnp.concatenate([xa, yb], -1)

    # ComposeTransform forward
    y = z
    for (w1, b1, w2, b2), swap in zip(params["couplings"], swaps):
        xa, xb = split(y, swap)
        m = jnp.maximum(xa @ w1 + b1, 0.0) @ w2 + b2
        y = join(xa, xb + m, swap)

    # TransformedDistribution.log_prob(y): invert transforms, Gaussian log_prob
    zr = y
    for (w1, b1, w2, b2), swap in reversed(list(zip(params["couplings"], swaps))):
        xa, xb = split(zr, swap)
        m = jnp.maximum(xa @ w1 + b1, 0.0) @ w2 + b2
        zr = join(xa, xb - m, swap)
    t = (zr - mu) / sig
    lp = (jnp.sum(-0.5 * t * t - ls, axis=-1, keepdims=True)
          - 0.5 * D * jnp.log(2.0 * jnp.pi))
    return y, lp


# ----------------------------------------------------------------------------
# Main
# ----------------------------------------------------------------------------

if __name__ == "__main__":
    B, Din, D, H = 16, 16, 32, 64   # batch, data dim, latent dim, coupling hidden
    half = D // 2
    n_couplings = 2

    key = jax.random.PRNGKey(0)
    keys = jax.random.split(key, 4 + 4 * n_couplings)

    x = jax.random.normal(keys[0], (B, Din), dtype=jnp.float32)
    eps = jax.random.normal(keys[1], (B, D), dtype=jnp.float32)

    w_embed = 0.1 * jax.random.normal(keys[2], (Din, 2 * D), dtype=jnp.float32)
    b_embed = 0.01 * jax.random.normal(keys[3], (1, 2 * D), dtype=jnp.float32)

    couplings = []
    swaps = []
    for li in range(n_couplings):
        k1, k2, k3, k4 = keys[4 + 4 * li: 8 + 4 * li]
        w1 = 0.1 * jax.random.normal(k1, (half, H), dtype=jnp.float32)
        b1 = 0.01 * jax.random.normal(k2, (1, H), dtype=jnp.float32)
        w2 = 0.1 * jax.random.normal(k3, (H, half), dtype=jnp.float32)
        b2 = 0.01 * jax.random.normal(k4, (1, half), dtype=jnp.float32)
        couplings.append((w1, b1, w2, b2))
        swaps.append(bool(li % 2))
    swaps = tuple(swaps)

    params = {"w_embed": w_embed, "b_embed": b_embed, "couplings": couplings}

    y, lp = nice_forward(x, eps, params, swaps=swaps)
    jax.block_until_ready((y, lp))

    # Validate against the pure-JAX reference that performs the full
    # TransformedDistribution semantics (including the inverse round-trip).
    y_ref, lp_ref = nice_forward_reference(x, eps, params, swaps)

    assert y.shape == (B, D) and lp.shape == (B, 1)
    assert jnp.all(jnp.isfinite(y)) and jnp.all(jnp.isfinite(lp))
    assert jnp.allclose(y, y_ref, atol=2e-4), "sample push-forward mismatch"
    # Exact eps-based log_prob -> tight tolerance (MXU vs XLA rounding only).
    assert jnp.allclose(lp, lp_ref, atol=5e-3, rtol=1e-4), "log_prob mismatch"

    print("KERNEL_OK")
</pallas_src>

<mosaic_0001>
module attributes {stable_mosaic.version = 11 : i64} {
  func.func @_nice_fused_kernel(%arg0: i32, %arg1: memref<8x16xf32, #tpu.memory_space<vmem>>, %arg2: memref<8x32xf32, #tpu.memory_space<vmem>>, %arg3: memref<16x64xf32, #tpu.memory_space<vmem>>, %arg4: memref<1x64xf32, #tpu.memory_space<vmem>>, %arg5: memref<16x64xf32, #tpu.memory_space<vmem>>, %arg6: memref<1x64xf32, #tpu.memory_space<vmem>>, %arg7: memref<64x16xf32, #tpu.memory_space<vmem>>, %arg8: memref<1x16xf32, #tpu.memory_space<vmem>>, %arg9: memref<16x64xf32, #tpu.memory_space<vmem>>, %arg10: memref<1x64xf32, #tpu.memory_space<vmem>>, %arg11: memref<64x16xf32, #tpu.memory_space<vmem>>, %arg12: memref<1x16xf32, #tpu.memory_space<vmem>>, %arg13: memref<8x32xf32, #tpu.memory_space<vmem>>, %arg14: memref<8x1xf32, #tpu.memory_space<vmem>>) attributes {dimension_semantics = [#tpu.dimension_semantics<parallel>], iteration_bounds = array<i64: 2>, scalar_prefetch = 0 : i64, scratch_operands = 0 : i64, tpu.core_type = #tpu.core_type<tc>, window_params = [{transform_indices = @transform_0, window_bounds = array<i64: 8, 16>}, {transform_indices = @transform_1, window_bounds = array<i64: 8, 32>}, {pipeline_mode = #tpu.pipeline_mode<synchronous>, transform_indices = @transform_2, window_bounds = array<i64: 16, 64>}, {pipeline_mode = #tpu.pipeline_mode<synchronous>, transform_indices = @transform_3, window_bounds = array<i64: 1, 64>}, {pipeline_mode = #tpu.pipeline_mode<synchronous>, transform_indices = @transform_4, window_bounds = array<i64: 16, 64>}, {pipeline_mode = #tpu.pipeline_mode<synchronous>, transform_indices = @transform_5, window_bounds = array<i64: 1, 64>}, {pipeline_mode = #tpu.pipeline_mode<synchronous>, transform_indices = @transform_6, window_bounds = array<i64: 64, 16>}, {pipeline_mode = #tpu.pipeline_mode<synchronous>, transform_indices = @transform_7, window_bounds = array<i64: 1, 16>}, {pipeline_mode = #tpu.pipeline_mode<synchronous>, transform_indices = @transform_8, window_bounds = array<i64: 16, 64>}, {pipeline_mode = #tpu.pipeline_mode<synchronous>, transform_indices = @transform_9, window_bounds = array<i64: 1, 64>}, {pipeline_mode = #tpu.pipeline_mode<synchronous>, transform_indices = @transform_10, window_bounds = array<i64: 64, 16>}, {pipeline_mode = #tpu.pipeline_mode<synchronous>, transform_indices = @transform_11, window_bounds = array<i64: 1, 16>}, {transform_indices = @transform_12, window_bounds = array<i64: 8, 32>}, {transform_indices = @transform_13, window_bounds = array<i64: 8, 1>}]} {
    %c0 = arith.constant 0 : index
    %c0_0 = arith.constant 0 : index
    %0 = vector.load %arg1[%c0, %c0_0] : memref<8x16xf32, #tpu.memory_space<vmem>>, vector<8x16xf32>
    %c0_1 = arith.constant 0 : index
    %c0_2 = arith.constant 0 : index
    %1 = vector.load %arg2[%c0_1, %c0_2] : memref<8x32xf32, #tpu.memory_space<vmem>>, vector<8x32xf32>
    %c0_3 = arith.constant 0 : index
    %c0_4 = arith.constant 0 : index
    %2 = vector.load %arg3[%c0_3, %c0_4] : memref<16x64xf32, #tpu.memory_space<vmem>>, vector<16x64xf32>
    %cst = arith.constant dense<0.000000e+00> : vector<8x64xf32>
    %3 = tpu.matmul %0, %2, %cst {dimension_numbers = #tpu.dot_dimension_numbers<[1], [0], [0], [1], [0, 0, 1, 1], [], []>} : vector<8x16xf32>, vector<16x64xf32>, vector<8x64xf32> -> vector<8x64xf32>
    %c0_5 = arith.constant 0 : index
    %c0_6 = arith.constant 0 : index
    %4 = vector.load %arg4[%c0_5, %c0_6] : memref<1x64xf32, #tpu.memory_space<vmem>>, vector<1x64xf32>
    %5 = vector.broadcast %4 : vector<1x64xf32> to vector<8x64xf32>
    %6 = arith.addf %3, %5 : vector<8x64xf32>
    %7 = vector.extract_strided_slice %6 {offsets = [0, 0], sizes = [8, 32], strides = [1, 1]} : vector<8x64xf32> to vector<8x32xf32>
    %8 = vector.extract_strided_slice %6 {offsets = [0, 32], sizes = [8, 32], strides = [1, 1]} : vector<8x64xf32> to vector<8x32xf32>
    %9 = math.exp %8 : vector<8x32xf32>
    %10 = arith.mulf %9, %1 : vector<8x32xf32>
    %11 = arith.addf %7, %10 : vector<8x32xf32>
    %cst_7 = arith.constant -5.000000e-01 : f32
    %12 = vector.broadcast %cst_7 : f32 to vector<8x32xf32>
    %13 = arith.mulf %12, %1 : vector<8x32xf32>
    %14 = arith.mulf %13, %1 : vector<8x32xf32>
    %15 = arith.subf %14, %8 : vector<8x32xf32>
    %cst_8 = arith.constant dense<0.000000e+00> : vector<8xf32>
    %16 = vector.multi_reduction <add>, %15, %cst_8 [1] : vector<8x32xf32> to vector<8xf32>
    %17 = vector.shape_cast %16 : vector<8xf32> to vector<8x1xf32>
    %cst_9 = arith.constant -29.4060326 : f32
    %18 = vector.broadcast %cst_9 : f32 to vector<8x1xf32>
    %19 = arith.addf %17, %18 : vector<8x1xf32>
    %c0_10 = arith.constant 0 : index
    %c0_11 = arith.constant 0 : index
    %20 = vector.load %arg14[%c0_10, %c0_11] : memref<8x1xf32, #tpu.memory_space<vmem>>, vector<8x1xf32>
    tpu.vector_store %arg14[%c0_10, %c0_11], %19 {strides = array<i32>} : memref<8x1xf32, #tpu.memory_space<vmem>>, vector<8x1xf32>,
    %21 = vector.extract_strided_slice %11 {offsets = [0, 0], sizes = [8, 16], strides = [1, 1]} : vector<8x32xf32> to vector<8x16xf32>
    %22 = vector.extract_strided_slice %11 {offsets = [0, 16], sizes = [8, 16], strides = [1, 1]} : vector<8x32xf32> to vector<8x16xf32>
    %c0_12 = arith.constant 0 : index
    %c0_13 = arith.constant 0 : index
    %23 = vector.load %arg5[%c0_12, %c0_13] : memref<16x64xf32, #tpu.memory_space<vmem>>, vector<16x64xf32>
    %c0_14 = arith.constant 0 : index
    %c0_15 = arith.constant 0 : index
    %24 = vector.load %arg6[%c0_14, %c0_15] : memref<1x64xf32, #tpu.memory_space<vmem>>, vector<1x64xf32>
    %c0_16 = arith.constant 0 : index
    %c0_17 = arith.constant 0 : index
    %25 = vector.load %arg7[%c0_16, %c0_17] : memref<64x16xf32, #tpu.memory_space<vmem>>, vector<64x16xf32>
    %c0_18 = arith.constant 0 : index
    %c0_19 = arith.constant 0 : index
    %26 = vector.load %arg8[%c0_18, %c0_19] : memref<1x16xf32, #tpu.memory_space<vmem>>, vector<1x16xf32>
    %cst_20 = arith.constant dense<0.000000e+00> : vector<8x64xf32>
    %27 = tpu.matmul %21, %23, %cst_20 {dimension_numbers = #tpu.dot_dimension_numbers<[1], [0], [0], [1], [0, 0, 1, 1], [], []>} : vector<8x16xf32>, vector<16x64xf32>, vector<8x64xf32> -> vector<8x64xf32>
    %28 = vector.broadcast %24 : vector<1x64xf32> to vector<8x64xf32>
    %29 = arith.addf %27, %28 : vector<8x64xf32>
    %cst_21 = arith.constant 0.000000e+00 : f32
    %30 = vector.broadcast %cst_21 : f32 to vector<8x64xf32>
    %31 = arith.maximumf %29, %30 : vector<8x64xf32>
    %cst_22 = arith.constant dense<0.000000e+00> : vector<8x16xf32>
    %32 = tpu.matmul %31, %25, %cst_22 {dimension_numbers = #tpu.dot_dimension_numbers<[1], [0], [0], [1], [0, 0, 1, 1], [], []>} : vector<8x64xf32>, vector<64x16xf32>, vector<8x16xf32> -> vector<8x16xf32>
    %33 = vector.broadcast %26 : vector<1x16xf32> to vector<8x16xf32>
    %34 = arith.addf %32, %33 : vector<8x16xf32>
    %35 = arith.addf %22, %34 : vector<8x16xf32>
    %c0_23 = arith.constant 0 : index
    %c0_24 = arith.constant 0 : index
    %36 = vector.load %arg9[%c0_23, %c0_24] : memref<16x64xf32, #tpu.memory_space<vmem>>, vector<16x64xf32>
    %c0_25 = arith.constant 0 : index
    %c0_26 = arith.constant 0 : index
    %37 = vector.load %arg10[%c0_25, %c0_26] : memref<1x64xf32, #tpu.memory_space<vmem>>, vector<1x64xf32>
    %c0_27 = arith.constant 0 : index
    %c0_28 = arith.constant 0 : index
    %38 = vector.load %arg11[%c0_27, %c0_28] : memref<64x16xf32, #tpu.memory_space<vmem>>, vector<64x16xf32>
    %c0_29 = arith.constant 0 : index
    %c0_30 = arith.constant 0 : index
    %39 = vector.load %arg12[%c0_29, %c0_30] : memref<1x16xf32, #tpu.memory_space<vmem>>, vector<1x16xf32>
    %cst_31 = arith.constant dense<0.000000e+00> : vector<8x64xf32>
    %40 = tpu.matmul %35, %36, %cst_31 {dimension_numbers = #tpu.dot_dimension_numbers<[1], [0], [0], [1], [0, 0, 1, 1], [], []>} : vector<8x16xf32>, vector<16x64xf32>, vector<8x64xf32> -> vector<8x64xf32>
    %41 = vector.broadcast %37 : vector<1x64xf32> to vector<8x64xf32>
    %42 = arith.addf %40, %41 : vector<8x64xf32>
    %cst_32 = arith.constant 0.000000e+00 : f32
    %43 = vector.broadcast %cst_32 : f32 to vector<8x64xf32>
    %44 = arith.maximumf %42, %43 : vector<8x64xf32>
    %cst_33 = arith.constant dense<0.000000e+00> : vector<8x16xf32>
    %45 = tpu.matmul %44, %38, %cst_33 {dimension_numbers = #tpu.dot_dimension_numbers<[1], [0], [0], [1], [0, 0, 1, 1], [], []>} : vector<8x64xf32>, vector<64x16xf32>, vector<8x16xf32> -> vector<8x16xf32>
    %46 = vector.broadcast %39 : vector<1x16xf32> to vector<8x16xf32>
    %47 = arith.addf %45, %46 : vector<8x16xf32>
    %48 = arith.addf %21, %47 : vector<8x16xf32>
    %c0_34 = arith.constant 0 : index
    %c0_35 = arith.constant 0 : index
    %49 = vector.load %arg13[%c0_34, %c0_35] : memref<8x32xf32, #tpu.memory_space<vmem>>, vector<8x16xf32>
    tpu.vector_store %arg13[%c0_34, %c0_35], %48 {strides = array<i32>} : memref<8x32xf32, #tpu.memory_space<vmem>>, vector<8x16xf32>,
    %c0_36 = arith.constant 0 : index
    %c16 = arith.constant 16 : index
    %50 = vector.load %arg13[%c0_36, %c16] : memref<8x32xf32, #tpu.memory_space<vmem>>, vector<8x16xf32>
    tpu.vector_store %arg13[%c0_36, %c16], %35 {strides = array<i32>} : memref<8x32xf32, #tpu.memory_space<vmem>>, vector<8x16xf32>,
    return
  }
  func.func @transform_0(%arg0: i32) -> (i32, i32) {
    %c0_i32 = arith.constant 0 : i32
    %c0_i32_0 = arith.constant 0 : i32
    return %arg0, %c0_i32 : i32, i32
  }
  func.func @transform_1(%arg0: i32) -> (i32, i32) {
    %c0_i32 = arith.constant 0 : i32
    %c0_i32_0 = arith.constant 0 : i32
    return %arg0, %c0_i32 : i32, i32
  }
  func.func @transform_2(%arg0: i32) -> (i32, i32) {
    %c0_i32 = arith.constant 0 : i32
    %c0_i32_0 = arith.constant 0 : i32
    %c0_i32_1 = arith.constant 0 : i32
    return %c0_i32, %c0_i32_0 : i32, i32
  }
  func.func @transform_3(%arg0: i32) -> (i32, i32) {
    %c0_i32 = arith.constant 0 : i32
    %c0_i32_0 = arith.constant 0 : i32
    %c0_i32_1 = arith.constant 0 : i32
    return %c0_i32, %c0_i32_0 : i32, i32
  }
  func.func @transform_4(%arg0: i32) -> (i32, i32) {
    %c0_i32 = arith.constant 0 : i32
    %c0_i32_0 = arith.constant 0 : i32
    %c0_i32_1 = arith.constant 0 : i32
    return %c0_i32, %c0_i32_0 : i32, i32
  }
  func.func @transform_5(%arg0: i32) -> (i32, i32) {
    %c0_i32 = arith.constant 0 : i32
    %c0_i32_0 = arith.constant 0 : i32
    %c0_i32_1 = arith.constant 0 : i32
    return %c0_i32, %c0_i32_0 : i32, i32
  }
  func.func @transform_6(%arg0: i32) -> (i32, i32) {
    %c0_i32 = arith.constant 0 : i32
    %c0_i32_0 = arith.constant 0 : i32
    %c0_i32_1 = arith.constant 0 : i32
    return %c0_i32, %c0_i32_0 : i32, i32
  }
  func.func @transform_7(%arg0: i32) -> (i32, i32) {
    %c0_i32 = arith.constant 0 : i32
    %c0_i32_0 = arith.constant 0 : i32
    %c0_i32_1 = arith.constant 0 : i32
    return %c0_i32, %c0_i32_0 : i32, i32
  }
  func.func @transform_8(%arg0: i32) -> (i32, i32) {
    %c0_i32 = arith.constant 0 : i32
    %c0_i32_0 = arith.constant 0 : i32
    %c0_i32_1 = arith.constant 0 : i32
    return %c0_i32, %c0_i32_0 : i32, i32
  }
  func.func @transform_9(%arg0: i32) -> (i32, i32) {
    %c0_i32 = arith.constant 0 : i32
    %c0_i32_0 = arith.constant 0 : i32
    %c0_i32_1 = arith.constant 0 : i32
    return %c0_i32, %c0_i32_0 : i32, i32
  }
  func.func @transform_10(%arg0: i32) -> (i32, i32) {
    %c0_i32 = arith.constant 0 : i32
    %c0_i32_0 = arith.constant 0 : i32
    %c0_i32_1 = arith.constant 0 : i32
    return %c0_i32, %c0_i32_0 : i32, i32
  }
  func.func @transform_11(%arg0: i32) -> (i32, i32) {
    %c0_i32 = arith.constant 0 : i32
    %c0_i32_0 = arith.constant 0 : i32
    %c0_i32_1 = arith.constant 0 : i32
    return %c0_i32, %c0_i32_0 : i32, i32
  }
  func.func @transform_12(%arg0: i32) -> (i32, i32) {
    %c0_i32 = arith.constant 0 : i32
    %c0_i32_0 = arith.constant 0 : i32
    return %arg0, %c0_i32 : i32, i32
  }
  func.func @transform_13(%arg0: i32) -> (i32, i32) {
    %c0_i32 = arith.constant 0 : i32
    %c0_i32_0 = arith.constant 0 : i32
    return %arg0, %c0_i32 : i32, i32
  }
}

</mosaic_0001>

<llo_original>
// kernel: nice_forward.1
$region0: #{nice_forward.1}
  #allocation0 [shape = 'u32[]', space=smem, size = 0x4, offset = 0x4, fixed_abs, tag = 'smem constant byte address 0x4 - core index']
  #allocation1 [shape = 'u32[144,128]{1,0:T(1,128)}', space=vmem, size = 0x12000, scoped, tag = 'internal scratch']
  %s0 = inlined_call_operand.vmem [shape: f32[16,16], index: 0, kind: input, shape index: {}]
  %s1 = inlined_call_operand.vmem [shape: f32[16,32], index: 1, kind: input, shape index: {}]
  %s2 = inlined_call_operand.vmem [shape: f32[16,64], index: 2, kind: input, shape index: {}]
  %s3 = inlined_call_operand.vmem [shape: f32[1,64], index: 3, kind: input, shape index: {}]
  %s4 = inlined_call_operand.vmem [shape: f32[16,64], index: 4, kind: input, shape index: {}]
  %s5 = inlined_call_operand.vmem [shape: f32[1,64], index: 5, kind: input, shape index: {}]
  %s6 = inlined_call_operand.vmem [shape: f32[64,16], index: 6, kind: input, shape index: {}]
  %s7 = inlined_call_operand.vmem [shape: f32[1,16], index: 7, kind: input, shape index: {}]
  %s8 = inlined_call_operand.vmem [shape: f32[16,64], index: 8, kind: input, shape index: {}]
  %s9 = inlined_call_operand.vmem [shape: f32[1,64], index: 9, kind: input, shape index: {}]
  %s10 = inlined_call_operand.vmem [shape: f32[64,16], index: 10, kind: input, shape index: {}]
  %s11 = inlined_call_operand.vmem [shape: f32[1,16], index: 11, kind: input, shape index: {}]
  %s12 = inlined_call_operand.hbm [shape: f32[16,32], index: 12, kind: output, shape index: {0}]
  %s13 = inlined_call_operand.vmem [shape: f32[16,1], index: 13, kind: output, shape index: {1}]
  %14 = xla_tuple %s12, %s13
  %s15 = sld [smem:[#allocation0]]
  $region89: #{nice_forward.1} parent=0
    _
  %s17 = ssub.s32 1, %s15
  %s18 = scalar_select 0, %s17, %s15
  $region1: #{nice_forward.1} parent=0
    #allocation2 [shape = 'u8[8192]{0}', space=vmem, size = 0x2000, scoped, tag = 'output window, operand 0']
    #allocation3 [shape = 's32[2]{0}', space=sflag, size = 0x8, scoped, tag = 'scoped memory for nice_forward.1']
    %19 = vsyncpa [#allocation3], 0
    %s20 = scalar_lea.sflag [#allocation3], 1
    %21 = vsyncpa %s20, 0
    loop: start=0, step=1, limit=4
    $region2: #{nice_forward.1} parent=1 // loop_pre_header
      _
    $region3: #{nice_forward.1} parent=1 // loop_header
      %s23 = sphi 0, %s27
      %p24 = scmp.ge.s32.totalorder %s23, 4
      %s33 = sphi 0, %s35
      %s36 = sphi 0, %s33
      %s37 = sphi 0, %s36
      %s53 = sphi 0, %s37
      %s59 = sphi 0, %s61
      %s62 = sphi 0, %s59
      %s63 = sphi 0, %s62
      %s79 = sphi 0, %s63
      %s83 = sphi 0, %s83
      %s85 = sphi 0, %s83
      %s86 = sphi 0, %s85
      %s100 = sphi 0, %s86
      %s104 = sphi 0, %s104
      %s106 = sphi 0, %s104
      %s107 = sphi 0, %s106
      %s121 = sphi 0, %s107
      %s125 = sphi 0, %s125
      %s127 = sphi 0, %s125
      %s128 = sphi 0, %s127
      %s142 = sphi 0, %s128
      %s146 = sphi 0, %s146
      %s148 = sphi 0, %s146
      %s149 = sphi 0, %s148
      %s163 = sphi 0, %s149
      %s167 = sphi 0, %s167
      %s169 = sphi 0, %s167
      %s170 = sphi 0, %s169
      %s184 = sphi 0, %s170
      %s188 = sphi 0, %s188
      %s190 = sphi 0, %s188
      %s191 = sphi 0, %s190
      %s205 = sphi 0, %s191
      %s209 = sphi 0, %s209
      %s211 = sphi 0, %s209
      %s212 = sphi 0, %s211
      %s226 = sphi 0, %s212
      %s230 = sphi 0, %s230
      %s232 = sphi 0, %s230
      %s233 = sphi 0, %s232
      %s247 = sphi 0, %s233
      %s251 = sphi 0, %s251
      %s253 = sphi 0, %s251
      %s254 = sphi 0, %s253
      %s268 = sphi 0, %s254
      %s272 = sphi 0, %s272
      %s274 = sphi 0, %s272
      %s275 = sphi 0, %s274
      %s289 = sphi 0, %s275
      %s295 = sphi 0, %s297
      %s298 = sphi 0, %s295
      %s299 = sphi 0, %s298
      %s315 = sphi 0, %s299
      %s321 = sphi 0, %s323
      %s324 = sphi 0, %s321
      %s325 = sphi 0, %s324
      %s341 = sphi 0, %s325
    $region4: #{nice_forward.1} parent=1 // loop_header_branch
      %26 = sbr.rel (%p24) target = $region8
    $region5: #{nice_forward.1} parent=1 // loop_body
      %s28 = ssub.s32 %s23, 1
      %s29 = ssub.s32 %s23, 2
      %s30 = sadd.s32 %s23, 1
      %s31 = ssub.s32 %s23, %s30
      %p32 = scmp.eq.s32.totalorder %s31, 0
      %s34 = sadd.s32 %s33, 1
      %s35 = scalar_select %p32, %s33, %s34
      %p38 = pneg %p32
      %p39 = scmp.eq.s32.totalorder %s23, 1
      %p40 = por %p38, %p39
      %p41 = scmp.ne.s32.totalorder %s33, %s36
      %p42 = scmp.eq.s32.totalorder %s23, 0
      %p43 = por %p41, %p42
      %p44 = scmp.ne.s32.totalorder %s33, %s36
      %p45 = scmp.eq.s32.totalorder %s28, 1
      %p46 = por %p44, %p45
      %p47 = scmp.ne.s32.totalorder %s36, %s37
      %p48 = scmp.eq.s32.totalorder %s28, 0
      %p49 = por %p47, %p48
      %p50 = scmp.ne.s32.totalorder %s36, %s37
      %p51 = scmp.eq.s32.totalorder %s29, 1
      %p52 = por %p50, %p51
      %p54 = scmp.ne.s32.totalorder %s37, %s53
      %p55 = scmp.eq.s32.totalorder %s29, 0
      %p56 = por %p54, %p55
      %s57 = ssub.s32 %s23, %s30
      %p58 = scmp.eq.s32.totalorder %s57, 0
      %s60 = sadd.s32 %s59, 1
      %s61 = scalar_select %p58, %s59, %s60
      %p64 = pneg %p58
      %p65 = scmp.eq.s32.totalorder %s23, 1
      %p66 = por %p64, %p65
      %p67 = scmp.ne.s32.totalorder %s59, %s62
      %p68 = scmp.eq.s32.totalorder %s23, 0
      %p69 = por %p67, %p68
      %p70 = scmp.ne.s32.totalorder %s59, %s62
      %p71 = scmp.eq.s32.totalorder %s28, 1
      %p72 = por %p70, %p71
      %p73 = scmp.ne.s32.totalorder %s62, %s63
      %p74 = scmp.eq.s32.totalorder %s28, 0
      %p75 = por %p73, %p74
      %p76 = scmp.ne.s32.totalorder %s62, %s63
      %p77 = scmp.eq.s32.totalorder %s29, 1
      %p78 = por %p76, %p77
      %p80 = scmp.ne.s32.totalorder %s63, %s79
      %p81 = scmp.eq.s32.totalorder %s29, 0
      %p82 = por %p80, %p81
      %s84 = sadd.s32 %s83, 1
      %p87 = scmp.eq.s32.totalorder %s23, 1
      %p88 = scmp.ne.s32.totalorder %s83, %s85
      %p89 = scmp.eq.s32.totalorder %s23, 0
      %p90 = por %p88, %p89
      %p91 = scmp.ne.s32.totalorder %s83, %s85
      %p92 = scmp.eq.s32.totalorder %s28, 1
      %p93 = por %p91, %p92
      %p94 = scmp.ne.s32.totalorder %s85, %s86
      %p95 = scmp.eq.s32.totalorder %s28, 0
      %p96 = por %p94, %p95
      %p97 = scmp.ne.s32.totalorder %s85, %s86
      %p98 = scmp.eq.s32.totalorder %s29, 1
      %p99 = por %p97, %p98
      %p101 = scmp.ne.s32.totalorder %s86, %s100
      %p102 = scmp.eq.s32.totalorder %s29, 0
      %p103 = por %p101, %p102
      %s105 = sadd.s32 %s104, 1
      %p108 = scmp.eq.s32.totalorder %s23, 1
      %p109 = scmp.ne.s32.totalorder %s104, %s106
      %p110 = scmp.eq.s32.totalorder %s23, 0
      %p111 = por %p109, %p110
      %p112 = scmp.ne.s32.totalorder %s104, %s106
      %p113 = scmp.eq.s32.totalorder %s28, 1
      %p114 = por %p112, %p113
      %p115 = scmp.ne.s32.totalorder %s106, %s107
      %p116 = scmp.eq.s32.totalorder %s28, 0
      %p117 = por %p115, %p116
      %p118 = scmp.ne.s32.totalorder %s106, %s107
      %p119 = scmp.eq.s32.totalorder %s29, 1
      %p120 = por %p118, %p119
      %p122 = scmp.ne.s32.totalorder %s107, %s121
      %p123 = scmp.eq.s32.totalorder %s29, 0
      %p124 = por %p122, %p123
      %s126 = sadd.s32 %s125, 1
      %p129 = scmp.eq.s32.totalorder %s23, 1
      %p130 = scmp.ne.s32.totalorder %s125, %s127
      %p131 = scmp.eq.s32.totalorder %s23, 0
      %p132 = por %p130, %p131
      %p133 = scmp.ne.s32.totalorder %s125, %s127
      %p134 = scmp.eq.s32.totalorder %s28, 1
      %p135 = por %p133, %p134
      %p136 = scmp.ne.s32.totalorder %s127, %s128
      %p137 = scmp.eq.s32.totalorder %s28, 0
      %p138 = por %p136, %p137
      %p139 = scmp.ne.s32.totalorder %s127, %s128
      %p140 = scmp.eq.s32.totalorder %s29, 1
      %p141 = por %p139, %p140
      %p143 = scmp.ne.s32.totalorder %s128, %s142
      %p144 = scmp.eq.s32.totalorder %s29, 0
      %p145 = por %p143, %p144
      %s147 = sadd.s32 %s146, 1
      %p150 = scmp.eq.s32.totalorder %s23, 1
      %p151 = scmp.ne.s32.totalorder %s146, %s148
      %p152 = scmp.eq.s32.totalorder %s23, 0
      %p153 = por %p151, %p152
      %p154 = scmp.ne.s32.totalorder %s146, %s148
      %p155 = scmp.eq.s32.totalorder %s28, 1
      %p156 = por %p154, %p155
      %p157 = scmp.ne.s32.totalorder %s148, %s149
      %p158 = scmp.eq.s32.totalorder %s28, 0
      %p159 = por %p157, %p158
      %p160 = scmp.ne.s32.totalorder %s148, %s149
      %p161 = scmp.eq.s32.totalorder %s29, 1
      %p162 = por %p160, %p161
      %p164 = scmp.ne.s32.totalorder %s149, %s163
      %p165 = scmp.eq.s32.totalorder %s29, 0
      %p166 = por %p164, %p165
      %s168 = sadd.s32 %s167, 1
      %p171 = scmp.eq.s32.totalorder %s23, 1
      %p172 = scmp.ne.s32.totalorder %s167, %s169
      %p173 = scmp.eq.s32.totalorder %s23, 0
      %p174 = por %p172, %p173
      %p175 = scmp.ne.s32.totalorder %s167, %s169
      %p176 = scmp.eq.s32.totalorder %s28, 1
      %p177 = por %p175, %p176
      %p178 = scmp.ne.s32.totalorder %s169, %s170
      %p179 = scmp.eq.s32.totalorder %s28, 0
      %p180 = por %p178, %p179
      %p181 = scmp.ne.s32.totalorder %s169, %s170
      %p182 = scmp.eq.s32.totalorder %s29, 1
      %p183 = por %p181, %p182
      %p185 = scmp.ne.s32.totalorder %s170, %s184
      %p186 = scmp.eq.s32.totalorder %s29, 0
      %p187 = por %p185, %p186
      %s189 = sadd.s32 %s188, 1
      %p192 = scmp.eq.s32.totalorder %s23, 1
      %p193 = scmp.ne.s32.totalorder %s188, %s190
      %p194 = scmp.eq.s32.totalorder %s23, 0
      %p195 = por %p193, %p194
      %p196 = scmp.ne.s32.totalorder %s188, %s190
      %p197 = scmp.eq.s32.totalorder %s28, 1
      %p198 = por %p196, %p197
      %p199 = scmp.ne.s32.totalorder %s190, %s191
      %p200 = scmp.eq.s32.totalorder %s28, 0
      %p201 = por %p199, %p200
      %p202 = scmp.ne.s32.totalorder %s190, %s191
      %p203 = scmp.eq.s32.totalorder %s29, 1
      %p204 = por %p202, %p203
      %p206 = scmp.ne.s32.totalorder %s191, %s205
      %p207 = scmp.eq.s32.totalorder %s29, 0
      %p208 = por %p206, %p207
      %s210 = sadd.s32 %s209, 1
      %p213 = scmp.eq.s32.totalorder %s23, 1
      %p214 = scmp.ne.s32.totalorder %s209, %s211
      %p215 = scmp.eq.s32.totalorder %s23, 0
      %p216 = por %p214, %p215
      %p217 = scmp.ne.s32.totalorder %s209, %s211
      %p218 = scmp.eq.s32.totalorder %s28, 1
      %p219 = por %p217, %p218
      %p220 = scmp.ne.s32.totalorder %s211, %s212
      %p221 = scmp.eq.s32.totalorder %s28, 0
      %p222 = por %p220, %p221
      %p223 = scmp.ne.s32.totalorder %s211, %s212
      %p224 = scmp.eq.s32.totalorder %s29, 1
      %p225 = por %p223, %p224
      %p227 = scmp.ne.s32.totalorder %s212, %s226
      %p228 = scmp.eq.s32.totalorder %s29, 0
      %p229 = por %p227, %p228
      %s231 = sadd.s32 %s230, 1
      %p234 = scmp.eq.s32.totalorder %s23, 1
      %p235 = scmp.ne.s32.totalorder %s230, %s232
      %p236 = scmp.eq.s32.totalorder %s23, 0
      %p237 = por %p235, %p236
      %p238 = scmp.ne.s32.totalorder %s230, %s232
      %p239 = scmp.eq.s32.totalorder %s28, 1
      %p240 = por %p238, %p239
      %p241 = scmp.ne.s32.totalorder %s232, %s233
      %p242 = scmp.eq.s32.totalorder %s28, 0
      %p243 = por %p241, %p242
      %p244 = scmp.ne.s32.totalorder %s232, %s233
      %p245 = scmp.eq.s32.totalorder %s29, 1
      %p246 = por %p244, %p245
      %p248 = scmp.ne.s32.totalorder %s233, %s247
      %p249 = scmp.eq.s32.totalorder %s29, 0
      %p250 = por %p248, %p249
      %s252 = sadd.s32 %s251, 1
      %p255 = scmp.eq.s32.totalorder %s23, 1
      %p256 = scmp.ne.s32.totalorder %s251, %s253
      %p257 = scmp.eq.s32.totalorder %s23, 0
      %p258 = por %p256, %p257
      %p259 = scmp.ne.s32.totalorder %s251, %s253
      %p260 = scmp.eq.s32.totalorder %s28, 1
      %p261 = por %p259, %p260
      %p262 = scmp.ne.s32.totalorder %s253, %s254
      %p263 = scmp.eq.s32.totalorder %s28, 0
      %p264 = por %p262, %p263
      %p265 = scmp.ne.s32.totalorder %s253, %s254
      %p266 = scmp.eq.s32.totalorder %s29, 1
      %p267 = por %p265, %p266
      %p269 = scmp.ne.s32.totalorder %s254, %s268
      %p270 = scmp.eq.s32.totalorder %s29, 0
      %p271 = por %p269, %p270
      %s273 = sadd.s32 %s272, 1
      %p276 = scmp.eq.s32.totalorder %s23, 1
      %p277 = scmp.ne.s32.totalorder %s272, %s274
      %p278 = scmp.eq.s32.totalorder %s23, 0
      %p279 = por %p277, %p278
      %p280 = scmp.ne.s32.totalorder %s272, %s274
      %p281 = scmp.eq.s32.totalorder %s28, 1
      %p282 = por %p280, %p281
      %p283 = scmp.ne.s32.totalorder %s274, %s275
      %p284 = scmp.eq.s32.totalorder %s28, 0
      %p285 = por %p283, %p284
      %p286 = scmp.ne.s32.totalorder %s274, %s275
      %p287 = scmp.eq.s32.totalorder %s29, 1
      %p288 = por %p286, %p287
      %p290 = scmp.ne.s32.totalorder %s275, %s289
      %p291 = scmp.eq.s32.totalorder %s29, 0
      %p292 = por %p290, %p291
      %s293 = ssub.s32 %s23, %s30
      %p294 = scmp.eq.s32.totalorder %s293, 0
      %s296 = sadd.s32 %s295, 1
      %s297 = scalar_select %p294, %s295, %s296
      %p300 = pneg %p294
      %p301 = scmp.eq.s32.totalorder %s23, 1
      %p302 = por %p300, %p301
      %p303 = scmp.ne.s32.totalorder %s295, %s298
      %p304 = scmp.eq.s32.totalorder %s23, 0
      %p305 = por %p303, %p304
      %p306 = scmp.ne.s32.totalorder %s295, %s298
      %p307 = scmp.eq.s32.totalorder %s28, 1
      %p308 = por %p306, %p307
      %p309 = scmp.ne.s32.totalorder %s298, %s299
      %p310 = scmp.eq.s32.totalorder %s28, 0
      %p311 = por %p309, %p310
      %p312 = scmp.ne.s32.totalorder %s298, %s299
      %p313 = scmp.eq.s32.totalorder %s29, 1
      %p314 = por %p312, %p313
      %p316 = scmp.ne.s32.totalorder %s299, %s315
      %p317 = scmp.eq.s32.totalorder %s29, 0
      %p318 = por %p316, %p317
      %s319 = ssub.s32 %s23, %s30
      %p320 = scmp.eq.s32.totalorder %s319, 0
      %s322 = sadd.s32 %s321, 1
      %s323 = scalar_select %p320, %s321, %s322
      %p326 = pneg %p320
      %p327 = scmp.eq.s32.totalorder %s23, 1
      %p328 = por %p326, %p327
      %p329 = scmp.ne.s32.totalorder %s321, %s324
      %p330 = scmp.eq.s32.totalorder %s23, 0
      %p331 = por %p329, %p330
      %p332 = scmp.ne.s32.totalorder %s321, %s324
      %p333 = scmp.eq.s32.totalorder %s28, 1
      %p334 = por %p332, %p333
      %p335 = scmp.ne.s32.totalorder %s324, %s325
      %p336 = scmp.eq.s32.totalorder %s28, 0
      %p337 = por %p335, %p336
      %p338 = scmp.ne.s32.totalorder %s324, %s325
      %p339 = scmp.eq.s32.totalorder %s29, 1
      %p340 = por %p338, %p339
      %p342 = scmp.ne.s32.totalorder %s325, %s341
      %p343 = scmp.eq.s32.totalorder %s29, 0
      %p344 = por %p342, %p343
      %p345 = scmp.le.s32.totalorder 1, %s23
      %p346 = scmp.lt.s32.totalorder %s23, 3
      %p347 = pnand %p345, %p346
      %p348 = pneg %p347
      // Predicated region
      $region9: #{nice_forward.1} parent=5 // pred_check
        _
      $region10: #{nice_forward.1} parent=5 // pred_check_branch
        %350 = sbr.rel (%p347) target = $region12
      $region11: #{nice_forward.1} parent=5 // pred_region
        %s351 = ssub.s32 %s23, 1
        // Predicated region
        $region13: #{nice_forward.1} parent=11 // pred_check
          %p352 = pneg %p96
        $region14: #{nice_forward.1} parent=11 // pred_check_branch
          %354 = sbr.rel (%p352) target = $region16
        $region15: #{nice_forward.1} parent=11 // pred_region
          _
        $region16: #{nice_forward.1} parent=11 // pred_fallthru
          _
        // Predicated region
        $region17: #{nice_forward.1} parent=11 // pred_check
          %p355 = pneg %p117
        $region18: #{nice_forward.1} parent=11 // pred_check_branch
          %357 = sbr.rel (%p355) target = $region20
        $region19: #{nice_forward.1} parent=11 // pred_region
          _
        $region20: #{nice_forward.1} parent=11 // pred_fallthru
          _
        // Predicated region
        $region21: #{nice_forward.1} parent=11 // pred_check
          %p358 = pneg %p138
        $region22: #{nice_forward.1} parent=11 // pred_check_branch
          %360 = sbr.rel (%p358) target = $region24
        $region23: #{nice_forward.1} parent=11 // pred_region
          _
        $region24: #{nice_forward.1} parent=11 // pred_fallthru
          _
        // Predicated region
        $region25: #{nice_forward.1} parent=11 // pred_check
          %p361 = pneg %p159
        $region26: #{nice_forward.1} parent=11 // pred_check_branch
          %363 = sbr.rel (%p361) target = $region28
        $region27: #{nice_forward.1} parent=11 // pred_region
          _
        $region28: #{nice_forward.1} parent=11 // pred_fallthru
          _
        // Predicated region
        $region29: #{nice_forward.1} parent=11 // pred_check
          %p364 = pneg %p180
        $region30: #{nice_forward.1} parent=11 // pred_check_branch
          %366 = sbr.rel (%p364) target = $region32
        $region31: #{nice_forward.1} parent=11 // pred_region
          _
        $region32: #{nice_forward.1} parent=11 // pred_fallthru
          _
        // Predicated region
        $region33: #{nice_forward.1} parent=11 // pred_check
          %p367 = pneg %p201
        $region34: #{nice_forward.1} parent=11 // pred_check_branch
          %369 = sbr.rel (%p367) target = $region36
        $region35: #{nice_forward.1} parent=11 // pred_region
          _
        $region36: #{nice_forward.1} parent=11 // pred_fallthru
          _
        // Predicated region
        $region37: #{nice_forward.1} parent=11 // pred_check
          %p370 = pneg %p222
        $region38: #{nice_forward.1} parent=11 // pred_check_branch
          %372 = sbr.rel (%p370) target = $region40
        $region39: #{nice_forward.1} parent=11 // pred_region
          _
        $region40: #{nice_forward.1} parent=11 // pred_fallthru
          _
        // Predicated region
        $region41: #{nice_forward.1} parent=11 // pred_check
          %p373 = pneg %p243
        $region42: #{nice_forward.1} parent=11 // pred_check_branch
          %375 = sbr.rel (%p373) target = $region44
        $region43: #{nice_forward.1} parent=11 // pred_region
          _
        $region44: #{nice_forward.1} parent=11 // pred_fallthru
          _
        // Predicated region
        $region45: #{nice_forward.1} parent=11 // pred_check
          %p376 = pneg %p264
        $region46: #{nice_forward.1} parent=11 // pred_check_branch
          %378 = sbr.rel (%p376) target = $region48
        $region47: #{nice_forward.1} parent=11 // pred_region
          _
        $region48: #{nice_forward.1} parent=11 // pred_fallthru
          _
        // Predicated region
        $region49: #{nice_forward.1} parent=11 // pred_check
          %p379 = pneg %p285
        $region50: #{nice_forward.1} parent=11 // pred_check_branch
          %381 = sbr.rel (%p379) target = $region52
        $region51: #{nice_forward.1} parent=11 // pred_region
          _
        $region52: #{nice_forward.1} parent=11 // pred_fallthru
          _
      $region12: #{nice_forward.1} parent=5 // pred_fallthru
        _
      %p382 = scmp.lt.s32.totalorder %s23, 2
      // Predicated region
      $region53: #{nice_forward.1} parent=5 // pred_check
        %p383 = pneg %p382
      $region54: #{nice_forward.1} parent=5 // pred_check_branch
        %385 = sbr.rel (%p383) target = $region56
      $region55: #{nice_forward.1} parent=5 // pred_region
        // Predicated region
        $region57: #{nice_forward.1} parent=55 // pred_check
          %p386 = pneg %p43
        $region58: #{nice_forward.1} parent=55 // pred_check_branch
          %388 = sbr.rel (%p386) target = $region60
        $region59: #{nice_forward.1} parent=55 // pred_region
          %p389 = scmp.lt.s32.totalorder %s23, 1
          %s390 = scalar_select %p389, %s23, 1
          %s391 = smul.addr %s390, 8
          %s392 = scalar_lea.vmem %s0, %s391
        $region60: #{nice_forward.1} parent=55 // pred_fallthru
          _
        // Predicated region
        $region61: #{nice_forward.1} parent=55 // pred_check
          %p393 = pneg %p69
        $region62: #{nice_forward.1} parent=55 // pred_check_branch
          %395 = sbr.rel (%p393) target = $region64
        $region63: #{nice_forward.1} parent=55 // pred_region
          %p396 = scmp.lt.s32.totalorder %s23, 1
          %s397 = scalar_select %p396, %s23, 1
          %s398 = smul.addr %s397, 8
          %s399 = scalar_lea.vmem %s1, %s398
        $region64: #{nice_forward.1} parent=55 // pred_fallthru
          _
      $region56: #{nice_forward.1} parent=5 // pred_fallthru
        _
      %p400 = scmp.le.s32.totalorder 1, %s23
      %p401 = scmp.lt.s32.totalorder %s23, 3
      %p402 = pnand %p400, %p401
      %p403 = pneg %p402
      // Predicated region
      $region65: #{nice_forward.1} parent=5 // pred_check
        _
      $region66: #{nice_forward.1} parent=5 // pred_check_branch
        %405 = sbr.rel (%p402) target = $region68
      $region67: #{nice_forward.1} parent=5 // pred_region
        %s406 = ssub.s32 %s23, 1
        %p407 = scmp.lt.s32.totalorder %s28, 1
        %s408 = scalar_select %p407, %s28, 1
        %s409 = smul.addr %s408, 8
        %s410 = scalar_lea.vmem %s0, %s409
        %p411 = pneg %p49
        %p412 = pneg %p46
        %p413 = scmp.lt.s32.totalorder %s28, 1
        %s414 = scalar_select %p413, %s28, 1
        %s415 = smul.addr %s414, 8
        %s416 = scalar_lea.vmem %s1, %s415
        %p417 = pneg %p75
        %p418 = pneg %p72
        %p419 = pneg %p96
        %p420 = pneg %p93
        %p421 = pneg %p117
        %p422 = pneg %p114
        %p423 = pneg %p138
        %p424 = pneg %p135
        %p425 = pneg %p159
        %p426 = pneg %p156
        %p427 = pneg %p180
        %p428 = pneg %p177
        %p429 = pneg %p201
        %p430 = pneg %p198
        %p431 = pneg %p222
        %p432 = pneg %p219
        %p433 = pneg %p243
        %p434 = pneg %p240
        %p435 = pneg %p264
        %p436 = pneg %p261
        %p437 = pneg %p285
        %p438 = pneg %p282
        %p439 = pneg %p311
        %p440 = pneg %p308
        %s441 = sand.u32 %s298, 1
        %s442 = scalar_lea.sflag [#allocation3], %s441
        %s443 = sand.u32 %s298, 1
        %s444 = smul.addr %s443, 8
        %s445 = scalar_lea.vmem [#allocation2], %s444
        %p446 = pneg %p337
        %p447 = pneg %p334
        %p448 = scmp.lt.s32.totalorder %s28, 1
        %s449 = scalar_select %p448, %s28, 1
        %s450 = smul.addr %s449, 8
        %s451 = scalar_lea.vmem %s13, %s450
        %p452 = scmp.lt.s32.totalorder %s28, 1
        %s453 = scalar_select %p452, %s28, 1
        %s454 = smul.addr %s453, 8
        %s455 = scalar_lea.vmem %s0, %s454
        %p456 = scmp.lt.s32.totalorder %s28, 1
        %s457 = scalar_select %p456, %s28, 1
        %s458 = smul.addr %s457, 8
        %s459 = scalar_lea.vmem %s1, %s458
        %p460 = scmp.lt.s32.totalorder %s28, 1
        %s461 = scalar_select %p460, %s28, 1
        %s462 = smul.addr %s461, 8
        %s463 = scalar_lea.vmem %s13, %s462
        %v464 = vld [vmem:[%s455] sm:$0xff]
        %v465 = vld [vmem:[%s459] sm:$0xff]
        %v466 = vld [vmem:[%s2] sm:$0xff]
        %v467 = vld [vmem:[%s2 + $0x8] sm:$0xff]
        %v468 = vld [vmem:[%s3] sm:$0x1]
        %v470 = vlaneseq
        %v471 = vshrl.u32 %v470, 7
        %v472 = vsub.s32 0, %v471
        %v473 = vrot.slane %v468, %v472
        %vm475 = vcmask 130048
        %v477 = vsel %vm475, %v464, 0
        %479 = vmatprep.subr.mxu0 0.0
        %480 = vmatpush1.msra.mxu0 %v466
        %481 = vmatprep.subr.mxu0 0.0
        %482 = vmatpush1.msra.mxu0 %v467
        %483 = vmatprep.subr.mxu0 0.0
        %484 = vmatpush1.msra.mxu0 0.0
        %485 = vmatprep.subr.mxu0 0.0
        %486 = vmatpush1.msra.mxu0 0.0
        %487 = vmatprep.subr.mxu0 0.0
        %488 = vmatpush1.msra.mxu0 0.0
        %489 = vmatprep.subr.mxu0 0.0
        %490 = vmatpush1.msra.mxu0 0.0
        %491 = vmatprep.subr.mxu0 0.0
        %492 = vmatpush1.msra.mxu0 0.0
        %493 = vmatprep.subr.mxu0 0.0
        %494 = vmatpush1.msra.mxu0 0.0
        %495 = vmatprep.subr.mxu0 0.0
        %496 = vmatpush1.msra.mxu0 0.0
        %497 = vmatprep.subr.mxu0 0.0
        %498 = vmatpush1.msra.mxu0 0.0
        %499 = vmatprep.subr.mxu0 0.0
        %500 = vmatpush1.msra.mxu0 0.0
        %501 = vmatprep.subr.mxu0 0.0
        %502 = vmatpush1.msra.mxu0 0.0
        %503 = vmatprep.subr.mxu0 0.0
        %504 = vmatpush1.msra.mxu0 0.0
        %505 = vmatprep.subr.mxu0 0.0
        %506 = vmatpush1.msra.mxu0 0.0
        %507 = vmatprep.subr.mxu0 0.0
        %508 = vmatpush1.msra.mxu0 0.0
        %509 = vmatprep.subr.mxu0 0.0
        %510 = vmatpush1.msra.mxu0 0.0
        %511 = vmatprep.subr.mxu0 0.0
        %512 = vmatpush1.msra.mxu0 0.0
        %513 = vmatprep.subr.mxu0 0.0
        %514 = vmatpush1.msra.mxu0 0.0
        %515 = vmatprep.subr.mxu0 0.0
        %516 = vmatpush1.msra.mxu0 0.0
        %517 = vmatprep.subr.mxu0 0.0
        %518 = vmatpush1.msra.mxu0 0.0
        %519 = vmatprep.subr.mxu0 0.0
        %520 = vmatpush1.msra.mxu0 0.0
        %521 = vmatprep.subr.mxu0 0.0
        %522 = vmatpush1.msra.mxu0 0.0
        %523 = vmatprep.subr.mxu0 0.0
        %524 = vmatpush1.msra.mxu0 0.0
        %525 = vmatprep.subr.mxu0 0.0
        %526 = vmatpush1.msra.mxu0 0.0
        %527 = vmatprep.subr.mxu0 0.0
        %528 = vmatpush1.msra.mxu0 0.0
        %529 = vmatprep.subr.mxu0 0.0
        %530 = vmatpush1.msra.mxu0 0.0
        %531 = vmatprep.subr.mxu0 0.0
        %532 = vmatpush1.msra.mxu0 0.0
        %533 = vmatprep.subr.mxu0 0.0
        %534 = vmatpush1.msra.mxu0 0.0
        %535 = vmatprep.subr.mxu0 0.0
        %536 = vmatpush1.msra.mxu0 0.0
        %537 = vmatprep.subr.mxu0 0.0
        %538 = vmatpush1.msra.mxu0 0.0
        %539 = vmatprep.subr.mxu0 0.0
        %540 = vmatpush1.msra.mxu0 0.0
        %541 = vmatprep.subr.mxu0 0.0
        %542 = vmatpush1.msra.mxu0 0.0
        %543 = vmatprep.mubr.f32.mxu0 0.0
        %544 = vmatmul.mubr.f32.gmra.mrb[0].mxu0 %v477
        %v545 = vpop.f32.mrb[0].mxu0
        %v546 = vadd.f32 %v473, %v545
        %v547 = vpop.f32.mrb[0].mxu0
        %548 = vdwg.mxu0
        %v549 = vmul.f32 %v546, 1.442695
        %v550 = vpow.pop %v549
        %552 = vrot.lane.b32.xlu0 %v465, 32
        %v553 = vpop.permute.xlu0 %552
        %v555 = vmul.f32 %v550, %v553
        %557 = vrot.lane.b32.xlu0 %v555, 96
        %v558 = vpop.permute.xlu0 %557
        %v560 = vadd.f32 %v546, %v558
        %v561 = vmul.f32 %v465, -0.5
        %v562 = vmul.f32 %v561, %v465
        %564 = vrot.lane.b32.xlu0 %v546, 96
        %v565 = vpop.permute.xlu0 %564
        %v567 = vsub.f32 %v562, %v565
        %vm568 = vcmask 261120
        %v569 = vsel %vm568, %v567, 0.0
        %570 = vadd.xlane.f32.xlu0 %v569
        %v571 = vpop.xlane.xlu0 %570
        %v572 = vadd.f32 %v571, -29.406033
        %vm573 = vcmask 7168
        %574 = vst.msk [vmem:[%s463] sm:$0xff] %vm573, %v572
        %v575 = vld [vmem:[%s4] sm:$0xff]
        %v576 = vld [vmem:[%s4 + $0x8] sm:$0xff]
        %v577 = vld [vmem:[%s5] sm:$0x1]
        %v578 = vld [vmem:[%s6] sm:$0xff]
        %v579 = vld [vmem:[%s6 + $0x8] sm:$0xff]
        %v580 = vld [vmem:[%s6 + $0x10] sm:$0xff]
        %v581 = vld [vmem:[%s6 + $0x18] sm:$0xff]
        %v582 = vld [vmem:[%s6 + $0x20] sm:$0xff]
        %v583 = vld [vmem:[%s6 + $0x28] sm:$0xff]
        %v584 = vld [vmem:[%s6 + $0x30] sm:$0xff]
        %v585 = vld [vmem:[%s6 + $0x38] sm:$0xff]
        %v586 = vld [vmem:[%s7] sm:$0x1]
        %v588 = vlaneseq
        %v589 = vshrl.u32 %v588, 7
        %v590 = vsub.s32 0, %v589
        %v591 = vrot.slane %v577, %v590
        %v594 = vsel %vm475, %v560, 0
        %596 = vmatprep.subr.mxu0 0.0
        %597 = vmatpush1.msra.mxu0 %v575
        %598 = vmatprep.subr.mxu0 0.0
        %599 = vmatpush1.msra.mxu0 %v576
        %600 = vmatprep.subr.mxu0 0.0
        %601 = vmatpush1.msra.mxu0 0.0
        %602 = vmatprep.subr.mxu0 0.0
        %603 = vmatpush1.msra.mxu0 0.0
        %604 = vmatprep.subr.mxu0 0.0
        %605 = vmatpush1.msra.mxu0 0.0
        %606 = vmatprep.subr.mxu0 0.0
        %607 = vmatpush1.msra.mxu0 0.0
        %608 = vmatprep.subr.mxu0 0.0
        %609 = vmatpush1.msra.mxu0 0.0
        %610 = vmatprep.subr.mxu0 0.0
        %611 = vmatpush1.msra.mxu0 0.0
        %612 = vmatprep.subr.mxu0 0.0
        %613 = vmatpush1.msra.mxu0 0.0
        %614 = vmatprep.subr.mxu0 0.0
        %615 = vmatpush1.msra.mxu0 0.0
        %616 = vmatprep.subr.mxu0 0.0
        %617 = vmatpush1.msra.mxu0 0.0
        %618 = vmatprep.subr.mxu0 0.0
        %619 = vmatpush1.msra.mxu0 0.0
        %620 = vmatprep.subr.mxu0 0.0
        %621 = vmatpush1.msra.mxu0 0.0
        %622 = vmatprep.subr.mxu0 0.0
        %623 = vmatpush1.msra.mxu0 0.0
        %624 = vmatprep.subr.mxu0 0.0
        %625 = vmatpush1.msra.mxu0 0.0
        %626 = vmatprep.subr.mxu0 0.0
        %627 = vmatpush1.msra.mxu0 0.0
        %628 = vmatprep.subr.mxu0 0.0
        %629 = vmatpush1.msra.mxu0 0.0
        %630 = vmatprep.subr.mxu0 0.0
        %631 = vmatpush1.msra.mxu0 0.0
        %632 = vmatprep.subr.mxu0 0.0
        %633 = vmatpush1.msra.mxu0 0.0
        %634 = vmatprep.subr.mxu0 0.0
        %635 = vmatpush1.msra.mxu0 0.0
        %636 = vmatprep.subr.mxu0 0.0
        %637 = vmatpush1.msra.mxu0 0.0
        %638 = vmatprep.subr.mxu0 0.0
        %639 = vmatpush1.msra.mxu0 0.0
        %640 = vmatprep.subr.mxu0 0.0
        %641 = vmatpush1.msra.mxu0 0.0
        %642 = vmatprep.subr.mxu0 0.0
        %643 = vmatpush1.msra.mxu0 0.0
        %644 = vmatprep.subr.mxu0 0.0
        %645 = vmatpush1.msra.mxu0 0.0
        %646 = vmatprep.subr.mxu0 0.0
        %647 = vmatpush1.msra.mxu0 0.0
        %648 = vmatprep.subr.mxu0 0.0
        %649 = vmatpush1.msra.mxu0 0.0
        %650 = vmatprep.subr.mxu0 0.0
        %651 = vmatpush1.msra.mxu0 0.0
        %652 = vmatprep.subr.mxu0 0.0
        %653 = vmatpush1.msra.mxu0 0.0
        %654 = vmatprep.subr.mxu0 0.0
        %655 = vmatpush1.msra.mxu0 0.0
        %656 = vmatprep.subr.mxu0 0.0
        %657 = vmatpush1.msra.mxu0 0.0
        %658 = vmatprep.subr.mxu0 0.0
        %659 = vmatpush1.msra.mxu0 0.0
        %660 = vmatprep.mubr.f32.mxu0 0.0
        %661 = vmatmul.mubr.f32.gmra.mrb[0].mxu0 %v594
        %v662 = vpop.f32.mrb[0].mxu0
        %v663 = vadd.f32 %v591, %v662
        %v664 = vpop.f32.mrb[0].mxu0
        %665 = vdwg.mxu0
        %v666 = vmax.f32 %v663, 0.0
        %v668 = vlaneseq
        %v669 = vshrl.u32 %v668, 7
        %v670 = vsub.s32 0, %v669
        %v671 = vrot.slane %v586, %v670
        %vm673 = vcmask 523264
        %v675 = vsel %vm673, %v666, 0
        %677 = vmatprep.subr.mxu0 0.0
        %678 = vmatpush1.msra.mxu0 %v578
        %679 = vmatprep.subr.mxu0 0.0
        %680 = vmatpush1.msra.mxu0 %v579
        %681 = vmatprep.subr.mxu0 0.0
        %682 = vmatpush1.msra.mxu0 %v580
        %683 = vmatprep.subr.mxu0 0.0
        %684 = vmatpush1.msra.mxu0 %v581
        %685 = vmatprep.subr.mxu0 0.0
        %686 = vmatpush1.msra.mxu0 %v582
        %687 = vmatprep.subr.mxu0 0.0
        %688 = vmatpush1.msra.mxu0 %v583
        %689 = vmatprep.subr.mxu0 0.0
        %690 = vmatpush1.msra.mxu0 %v584
        %691 = vmatprep.subr.mxu0 0.0
        %692 = vmatpush1.msra.mxu0 %v585
        %693 = vmatprep.subr.mxu0 0.0
        %694 = vmatpush1.msra.mxu0 0.0
        %695 = vmatprep.subr.mxu0 0.0
        %696 = vmatpush1.msra.mxu0 0.0
        %697 = vmatprep.subr.mxu0 0.0
        %698 = vmatpush1.msra.mxu0 0.0
        %699 = vmatprep.subr.mxu0 0.0
        %700 = vmatpush1.msra.mxu0 0.0
        %701 = vmatprep.subr.mxu0 0.0
        %702 = vmatpush1.msra.mxu0 0.0
        %703 = vmatprep.subr.mxu0 0.0
        %704 = vmatpush1.msra.mxu0 0.0
        %705 = vmatprep.subr.mxu0 0.0
        %706 = vmatpush1.msra.mxu0 0.0
        %707 = vmatprep.subr.mxu0 0.0
        %708 = vmatpush1.msra.mxu0 0.0
        %709 = vmatprep.subr.mxu0 0.0
        %710 = vmatpush1.msra.mxu0 0.0
        %711 = vmatprep.subr.mxu0 0.0
        %712 = vmatpush1.msra.mxu0 0.0
        %713 = vmatprep.subr.mxu0 0.0
        %714 = vmatpush1.msra.mxu0 0.0
        %715 = vmatprep.subr.mxu0 0.0
        %716 = vmatpush1.msra.mxu0 0.0
        %717 = vmatprep.subr.mxu0 0.0
        %718 = vmatpush1.msra.mxu0 0.0
        %719 = vmatprep.subr.mxu0 0.0
        %720 = vmatpush1.msra.mxu0 0.0
        %721 = vmatprep.subr.mxu0 0.0
        %722 = vmatpush1.msra.mxu0 0.0
        %723 = vmatprep.subr.mxu0 0.0
        %724 = vmatpush1.msra.mxu0 0.0
        %725 = vmatprep.subr.mxu0 0.0
        %726 = vmatpush1.msra.mxu0 0.0
        %727 = vmatprep.subr.mxu0 0.0
        %728 = vmatpush1.msra.mxu0 0.0
        %729 = vmatprep.subr.mxu0 0.0
        %730 = vmatpush1.msra.mxu0 0.0
        %731 = vmatprep.subr.mxu0 0.0
        %732 = vmatpush1.msra.mxu0 0.0
        %733 = vmatprep.subr.mxu0 0.0
        %734 = vmatpush1.msra.mxu0 0.0
        %735 = vmatprep.subr.mxu0 0.0
        %736 = vmatpush1.msra.mxu0 0.0
        %737 = vmatprep.subr.mxu0 0.0
        %738 = vmatpush1.msra.mxu0 0.0
        %739 = vmatprep.subr.mxu0 0.0
        %740 = vmatpush1.msra.mxu0 0.0
        %741 = vmatprep.mubr.f32.mxu0 0.0
        %742 = vmatmul.mubr.f32.gmra.mrb[0].mxu0 %v675
        %v743 = vpop.f32.mrb[0].mxu0
        %v744 = vadd.f32 %v671, %v743
        %v745 = vpop.f32.mrb[0].mxu0
        %746 = vdwg.mxu0
        %748 = vrot.lane.b32.xlu0 %v744, 16
        %v749 = vpop.permute.xlu0 %748
        %v751 = vadd.f32 %v560, %v749
        %v752 = vld [vmem:[%s8] sm:$0xff]
        %v753 = vld [vmem:[%s8 + $0x8] sm:$0xff]
        %v754 = vld [vmem:[%s9] sm:$0x1]
        %v755 = vld [vmem:[%s10] sm:$0xff]
        %v756 = vld [vmem:[%s10 + $0x8] sm:$0xff]
        %v757 = vld [vmem:[%s10 + $0x10] sm:$0xff]
        %v758 = vld [vmem:[%s10 + $0x18] sm:$0xff]
        %v759 = vld [vmem:[%s10 + $0x20] sm:$0xff]
        %v760 = vld [vmem:[%s10 + $0x28] sm:$0xff]
        %v761 = vld [vmem:[%s10 + $0x30] sm:$0xff]
        %v762 = vld [vmem:[%s10 + $0x38] sm:$0xff]
        %v763 = vld [vmem:[%s11] sm:$0x1]
        %v765 = vlaneseq
        %v766 = vshrl.u32 %v765, 7
        %v767 = vsub.s32 0, %v766
        %v768 = vrot.slane %v754, %v767
        %771 = vrot.lane.b32.xlu0 %v751, 112
        %v772 = vpop.permute.xlu0 %771
        %v773 = vsel %vm475, %v772, 0
        %775 = vmatprep.subr.mxu0 0.0
        %776 = vmatpush1.msra.mxu0 %v752
        %777 = vmatprep.subr.mxu0 0.0
        %778 = vmatpush1.msra.mxu0 %v753
        %779 = vmatprep.subr.mxu0 0.0
        %780 = vmatpush1.msra.mxu0 0.0
        %781 = vmatprep.subr.mxu0 0.0
        %782 = vmatpush1.msra.mxu0 0.0
        %783 = vmatprep.subr.mxu0 0.0
        %784 = vmatpush1.msra.mxu0 0.0
        %785 = vmatprep.subr.mxu0 0.0
        %786 = vmatpush1.msra.mxu0 0.0
        %787 = vmatprep.subr.mxu0 0.0
        %788 = vmatpush1.msra.mxu0 0.0
        %789 = vmatprep.subr.mxu0 0.0
        %790 = vmatpush1.msra.mxu0 0.0
        %791 = vmatprep.subr.mxu0 0.0
        %792 = vmatpush1.msra.mxu0 0.0
        %793 = vmatprep.subr.mxu0 0.0
        %794 = vmatpush1.msra.mxu0 0.0
        %795 = vmatprep.subr.mxu0 0.0
        %796 = vmatpush1.msra.mxu0 0.0
        %797 = vmatprep.subr.mxu0 0.0
        %798 = vmatpush1.msra.mxu0 0.0
        %799 = vmatprep.subr.mxu0 0.0
        %800 = vmatpush1.msra.mxu0 0.0
        %801 = vmatprep.subr.mxu0 0.0
        %802 = vmatpush1.msra.mxu0 0.0
        %803 = vmatprep.subr.mxu0 0.0
        %804 = vmatpush1.msra.mxu0 0.0
        %805 = vmatprep.subr.mxu0 0.0
        %806 = vmatpush1.msra.mxu0 0.0
        %807 = vmatprep.subr.mxu0 0.0
        %808 = vmatpush1.msra.mxu0 0.0
        %809 = vmatprep.subr.mxu0 0.0
        %810 = vmatpush1.msra.mxu0 0.0
        %811 = vmatprep.subr.mxu0 0.0
        %812 = vmatpush1.msra.mxu0 0.0
        %813 = vmatprep.subr.mxu0 0.0
        %814 = vmatpush1.msra.mxu0 0.0
        %815 = vmatprep.subr.mxu0 0.0
        %816 = vmatpush1.msra.mxu0 0.0
        %817 = vmatprep.subr.mxu0 0.0
        %818 = vmatpush1.msra.mxu0 0.0
        %819 = vmatprep.subr.mxu0 0.0
        %820 = vmatpush1.msra.mxu0 0.0
        %821 = vmatprep.subr.mxu0 0.0
        %822 = vmatpush1.msra.mxu0 0.0
        %823 = vmatprep.subr.mxu0 0.0
        %824 = vmatpush1.msra.mxu0 0.0
        %825 = vmatprep.subr.mxu0 0.0
        %826 = vmatpush1.msra.mxu0 0.0
        %827 = vmatprep.subr.mxu0 0.0
        %828 = vmatpush1.msra.mxu0 0.0
        %829 = vmatprep.subr.mxu0 0.0
        %830 = vmatpush1.msra.mxu0 0.0
        %831 = vmatprep.subr.mxu0 0.0
        %832 = vmatpush1.msra.mxu0 0.0
        %833 = vmatprep.subr.mxu0 0.0
        %834 = vmatpush1.msra.mxu0 0.0
        %835 = vmatprep.subr.mxu0 0.0
        %836 = vmatpush1.msra.mxu0 0.0
        %837 = vmatprep.subr.mxu0 0.0
        %838 = vmatpush1.msra.mxu0 0.0
        %839 = vmatprep.mubr.f32.mxu0 0.0
        %840 = vmatmul.mubr.f32.gmra.mrb[0].mxu0 %v773
        %v841 = vpop.f32.mrb[0].mxu0
        %v842 = vadd.f32 %v768, %v841
        %v843 = vpop.f32.mrb[0].mxu0
        %844 = vdwg.mxu0
        %v845 = vmax.f32 %v842, 0.0
        %v847 = vlaneseq
        %v848 = vshrl.u32 %v847, 7
        %v849 = vsub.s32 0, %v848
        %v850 = vrot.slane %v763, %v849
        %v853 = vsel %vm673, %v845, 0
        %855 = vmatprep.subr.mxu0 0.0
        %856 = vmatpush1.msra.mxu0 %v755
        %857 = vmatprep.subr.mxu0 0.0
        %858 = vmatpush1.msra.mxu0 %v756
        %859 = vmatprep.subr.mxu0 0.0
        %860 = vmatpush1.msra.mxu0 %v757
        %861 = vmatprep.subr.mxu0 0.0
        %862 = vmatpush1.msra.mxu0 %v758
        %863 = vmatprep.subr.mxu0 0.0
        %864 = vmatpush1.msra.mxu0 %v759
        %865 = vmatprep.subr.mxu0 0.0
        %866 = vmatpush1.msra.mxu0 %v760
        %867 = vmatprep.subr.mxu0 0.0
        %868 = vmatpush1.msra.mxu0 %v761
        %869 = vmatprep.subr.mxu0 0.0
        %870 = vmatpush1.msra.mxu0 %v762
        %871 = vmatprep.subr.mxu0 0.0
        %872 = vmatpush1.msra.mxu0 0.0
        %873 = vmatprep.subr.mxu0 0.0
        %874 = vmatpush1.msra.mxu0 0.0
        %875 = vmatprep.subr.mxu0 0.0
        %876 = vmatpush1.msra.mxu0 0.0
        %877 = vmatprep.subr.mxu0 0.0
        %878 = vmatpush1.msra.mxu0 0.0
        %879 = vmatprep.subr.mxu0 0.0
        %880 = vmatpush1.msra.mxu0 0.0
        %881 = vmatprep.subr.mxu0 0.0
        %882 = vmatpush1.msra.mxu0 0.0
        %883 = vmatprep.subr.mxu0 0.0
        %884 = vmatpush1.msra.mxu0 0.0
        %885 = vmatprep.subr.mxu0 0.0
        %886 = vmatpush1.msra.mxu0 0.0
        %887 = vmatprep.subr.mxu0 0.0
        %888 = vmatpush1.msra.mxu0 0.0
        %889 = vmatprep.subr.mxu0 0.0
        %890 = vmatpush1.msra.mxu0 0.0
        %891 = vmatprep.subr.mxu0 0.0
        %892 = vmatpush1.msra.mxu0 0.0
        %893 = vmatprep.subr.mxu0 0.0
        %894 = vmatpush1.msra.mxu0 0.0
        %895 = vmatprep.subr.mxu0 0.0
        %896 = vmatpush1.msra.mxu0 0.0
        %897 = vmatprep.subr.mxu0 0.0
        %898 = vmatpush1.msra.mxu0 0.0
        %899 = vmatprep.subr.mxu0 0.0
        %900 = vmatpush1.msra.mxu0 0.0
        %901 = vmatprep.subr.mxu0 0.0
        %902 = vmatpush1.msra.mxu0 0.0
        %903 = vmatprep.subr.mxu0 0.0
        %904 = vmatpush1.msra.mxu0 0.0
        %905 = vmatprep.subr.mxu0 0.0
        %906 = vmatpush1.msra.mxu0 0.0
        %907 = vmatprep.subr.mxu0 0.0
        %908 = vmatpush1.msra.mxu0 0.0
        %909 = vmatprep.subr.mxu0 0.0
        %910 = vmatpush1.msra.mxu0 0.0
        %911 = vmatprep.subr.mxu0 0.0
        %912 = vmatpush1.msra.mxu0 0.0
        %913 = vmatprep.subr.mxu0 0.0
        %914 = vmatpush1.msra.mxu0 0.0
        %915 = vmatprep.subr.mxu0 0.0
        %916 = vmatpush1.msra.mxu0 0.0
        %917 = vmatprep.subr.mxu0 0.0
        %918 = vmatpush1.msra.mxu0 0.0
        %919 = vmatprep.mubr.f32.mxu0 0.0
        %920 = vmatmul.mubr.f32.gmra.mrb[0].mxu0 %v853
        %v921 = vpop.f32.mrb[0].mxu0
        %v922 = vadd.f32 %v850, %v921
        %v923 = vpop.f32.mrb[0].mxu0
        %924 = vdwg.mxu0
        %v925 = vadd.f32 %v560, %v922
        %926 = vst.msk [vmem:[%s445] sm:$0xff] %vm475, %v925
        %vm927 = vcmask 261248
        %928 = vst.msk [vmem:[%s445] sm:$0xff] %vm927, %v751
        %s929 = sand.u32 %s298, 1
        %s930 = scalar_lea.sflag [#allocation3], %s929
        %s931 = sand.u32 %s298, 1
        %s932 = smul.addr %s931, 8
        %s933 = scalar_lea.vmem [#allocation2], %s932
        %p934 = scmp.lt.s32.totalorder %s28, 1
        %s935 = scalar_select %p934, %s28, 1
        %s936 = smul.addr %s935, 8
        %s937 = scalar_lea.vmem %s13, %s936
        // Predicated region
        $region69: #{nice_forward.1} parent=67 // pred_check
          %p938 = pneg %p308
        $region70: #{nice_forward.1} parent=67 // pred_check_branch
          %940 = sbr.rel (%p938) target = $region72
        $region71: #{nice_forward.1} parent=67 // pred_region
          %s942 = ssub.s32 128, 128
          %943 = vsyncadd %s930, %s942
          %s944 = smul.addr %s28, 128
          %s945 = scalar_lea.hbm %s12, %s944
          %s947 = sshll.u32 %s933, 4
          %s948 = int_to_ptr.vmem [resolvable:$true] %s947
          %950 = dma.vmem_to_hbm [thread:$0]  %s948, 128, %s945, %s930
        $region72: #{nice_forward.1} parent=67 // pred_fallthru
          _
        // Predicated region
        $region73: #{nice_forward.1} parent=67 // pred_check
          %p951 = pneg %p334
        $region74: #{nice_forward.1} parent=67 // pred_check_branch
          %953 = sbr.rel (%p951) target = $region76
        $region75: #{nice_forward.1} parent=67 // pred_region
          _
        $region76: #{nice_forward.1} parent=67 // pred_fallthru
          _
      $region68: #{nice_forward.1} parent=5 // pred_fallthru
        _
      %p954 = scmp.le.s32.totalorder 2, %s23
      // Predicated region
      $region77: #{nice_forward.1} parent=5 // pred_check
        %p955 = pneg %p954
      $region78: #{nice_forward.1} parent=5 // pred_check_branch
        %957 = sbr.rel (%p955) target = $region80
      $region79: #{nice_forward.1} parent=5 // pred_region
        %s958 = ssub.s32 %s23, 2
        // Predicated region
        $region81: #{nice_forward.1} parent=79 // pred_check
          %p959 = pneg %p314
        $region82: #{nice_forward.1} parent=79 // pred_check_branch
          %961 = sbr.rel (%p959) target = $region84
        $region83: #{nice_forward.1} parent=79 // pred_region
          %s962 = sand.u32 %s299, 1
          %s963 = scalar_lea.sflag [#allocation3], %s962
          %s964 = sand.u32 %s299, 1
          %s965 = smul.addr %s964, 8
          %s966 = scalar_lea.vmem [#allocation2], %s965
          %967 = dma.done %s963, 128
        $region84: #{nice_forward.1} parent=79 // pred_fallthru
          _
        // Predicated region
        $region85: #{nice_forward.1} parent=79 // pred_check
          %p968 = pneg %p340
        $region86: #{nice_forward.1} parent=79 // pred_check_branch
          %970 = sbr.rel (%p968) target = $region88
        $region87: #{nice_forward.1} parent=79 // pred_region
          %p971 = scmp.lt.s32.totalorder %s29, 1
          %s972 = scalar_select %p971, %s29, 1
          %s973 = smul.addr %s972, 8
          %s974 = scalar_lea.vmem %s13, %s973
        $region88: #{nice_forward.1} parent=79 // pred_fallthru
          _
      $region80: #{nice_forward.1} parent=5 // pred_fallthru
        _
    $region6: #{nice_forward.1} parent=1 // loop_footer
      %s27 = sadd.s32 1, %s23
    $region7: #{nice_forward.1} parent=1 // loop_footer_branch
      %22 = sbr.rel target = $region3
    $region8: #{nice_forward.1} parent=1 // loop_exit
      _
    %975 = vsyncpa [#allocation3], 1
    %s976 = scalar_lea.sflag [#allocation3], 1
    %977 = vsyncpa %s976, 1

</llo_original>
